<compile_context>
chip_gen: v6e
topology: v6e:2x2x1
jax: 0.10.0
libtpu: 0.0.40
codegen_flags: <defaults>
</compile_context>

<pallas_src>
import functools

import jax
import jax.numpy as jnp
from jax.experimental import pallas as pl
from jax.experimental.pallas import tpu as pltpu

LANE = 128
SUBLANE = 8


def _round_up(n, m):
    return ((n + m - 1) // m) * m


def _qnet_kernel(x_ref, w1_ref, b1_ref, w2_ref, b2_ref, o_ref):
    # x_ref: (TB, IN)   w1_ref: (IN, H)    b1_ref: (1, H)
    # w2_ref: (H, OUT_P) b2_ref: (1, OUT_P) o_ref: (TB, OUT_P)
    x = x_ref[...].astype(w1_ref.dtype)
    # Linear 1 + ReLU: MXU matmul (K=11 is padded in-vreg by Mosaic),
    # f32 accumulate, f32 epilogue on the VPU (v5e-safe).
    h = jnp.dot(x, w1_ref[...], preferred_element_type=jnp.float32) + b1_ref[...]
    h = jnp.maximum(h, 0.0)
    # Linear 2: lane-dense padded N -> unmasked full-vreg stores.
    out = jnp.dot(h.astype(w2_ref.dtype), w2_ref[...],
                  preferred_element_type=jnp.float32) + b2_ref[...]
    o_ref[...] = out.astype(o_ref.dtype)


def prepare_params(w1, b1, w2, b2, *, matmul_dtype=None):
    """One-time parameter prep (keep OUT of the per-step hot path).

    w1: (hidden, in), b1: (hidden,), w2: (out, hidden), b2: (out,)  [torch layout]
    Returns (w1_t, b1_r, w2_t, b2_r):
      w1_t: (in, hidden)       pre-transposed, NOT K-padded (Mosaic pads in-vreg)
      b1_r: (1, hidden)        f32
      w2_t: (hidden, out_pad)  pre-transposed, N zero-padded to a 128-lane width
      b2_r: (1, out_pad)       f32, zero-padded

    matmul_dtype=jnp.bfloat16 only trims the one-time weight DMA (weights are
    VMEM-resident across the grid), so it is rarely worth the accuracy cost at
    these sizes; keep f32 unless x HBM traffic at large B shows in a profile.
    """
    hid, in_sz = w1.shape
    out_sz, _ = w2.shape
    out_p = _round_up(out_sz, LANE)
    wdt = w1.dtype if matmul_dtype is None else matmul_dtype

    w1_t = jnp.transpose(w1).astype(wdt)                                   # (in, hid)
    w2_t = jnp.zeros((hid, out_p), wdt).at[:, :out_sz].set(
        jnp.transpose(w2).astype(wdt))                                     # (hid, out_p)
    b1_r = b1.reshape(1, hid).astype(jnp.float32)
    b2_r = jnp.zeros((1, out_p), jnp.float32).at[:, :out_sz].set(
        b2.astype(jnp.float32))
    return w1_t, b1_r, w2_t, b2_r


@functools.partial(jax.jit, static_argnames=("out_size", "block_b"))
def linear_qnet_forward(x, w1_t, b1_r, w2_t, b2_r, *, out_size, block_b=1024):
    """x: (B, input_size) f32. Params from prepare_params. Returns (B, out_size)."""
    B, in_sz = x.shape
    in_w, hid = w1_t.shape
    assert in_w == in_sz, "x feature dim must match prepared w1"
    _, out_p = w2_t.shape

    # Guard the (8,128) block rule and size the batch tile adaptively:
    # fewest balanced tiles, each a multiple of 8 rows. Typical batches run in
    # a single grid step; on v7x, batches larger than block_b naturally give a
    # grid >= 2 so "parallel" shards across both TensorCores.
    block_b = max(SUBLANE, _round_up(block_b, SUBLANE))
    b8 = _round_up(B, SUBLANE)
    g = -(-b8 // block_b)                       # number of batch tiles
    tb = _round_up(-(-b8 // g), SUBLANE)        # balanced tile, multiple of 8
    b_pad = g * tb                              # at most a few sublanes of padding

    # Pad batch rows only (no K padding of activations).
    x_p = jnp.pad(x, ((0, b_pad - B), (0, 0))) if b_pad != B else x

    # Cost hint with the REAL (unpadded) dims.
    flops = 2 * B * (in_sz * hid + hid * out_size)
    bytes_accessed = 4 * (B * in_sz + in_sz * hid + hid
                          + hid * out_size + out_size + B * out_size)

    out_padded = pl.pallas_call(
        _qnet_kernel,
        out_shape=jax.ShapeDtypeStruct((b_pad, out_p), x.dtype),
        grid_spec=pltpu.PrefetchScalarGridSpec(
            num_scalar_prefetch=0,
            grid=(g,),
            in_specs=[
                # Activations: tiled over batch; last dim 11 == full array dim (legal).
                pl.BlockSpec((tb, in_sz), lambda i: (i, 0)),
                # Weights / biases: constant index maps -> VMEM-resident.
                pl.BlockSpec((in_sz, hid), lambda i: (0, 0)),
                pl.BlockSpec((1, hid), lambda i: (0, 0)),
                pl.BlockSpec((hid, out_p), lambda i: (0, 0)),
                pl.BlockSpec((1, out_p), lambda i: (0, 0)),
            ],
            out_specs=pl.BlockSpec((tb, out_p), lambda i: (i, 0)),
        ),
        compiler_params=pltpu.CompilerParams(
            dimension_semantics=("parallel",)),
        cost_estimate=pl.CostEstimate(
            flops=flops, transcendentals=0, bytes_accessed=bytes_accessed),
    )(x_p, w1_t, b1_r, w2_t, b2_r)

    # Narrow-output slice; for very large B, consumers that can take the
    # padded (B, 128) array (e.g. argmax over the first 3 cols) should skip it.
    return out_padded[:B, :out_size]


def init_params(key, input_size, hidden_size, output_size, dtype=jnp.float32):
    """Deterministic init matching torch.nn.Linear defaults (U[-1/sqrt(fan_in), +])."""
    k1, k2, k3, k4 = jax.random.split(key, 4)
    bound1 = 1.0 / jnp.sqrt(input_size)
    bound2 = 1.0 / jnp.sqrt(hidden_size)
    w1 = jax.random.uniform(k1, (hidden_size, input_size), dtype, -bound1, bound1)
    b1 = jax.random.uniform(k2, (hidden_size,), dtype, -bound1, bound1)
    w2 = jax.random.uniform(k3, (output_size, hidden_size), dtype, -bound2, bound2)
    b2 = jax.random.uniform(k4, (output_size,), dtype, -bound2, bound2)
    return w1, b1, w2, b2


# TODO(synk): save()/load() (torch.save checkpoints) and SummaryWriter are host-side
# I/O with no kernel equivalent; only the forward pass is implemented here.

if __name__ == "__main__":
    # Canonical Linear_QNet sizes from the module's classmethod: (11, 256, 3).
    input_size, hidden_size, output_size = 11, 256, 3
    batch = 2

    key = jax.random.PRNGKey(0)
    kx, kp = jax.random.split(key)
    x = jax.random.normal(kx, (batch, input_size), dtype=jnp.float32)
    w1, b1, w2, b2 = init_params(kp, input_size, hidden_size, output_size)

    # One-time param prep, hoisted out of the per-step forward path.
    params = jax.block_until_ready(prepare_params(w1, b1, w2, b2))  # f32 demo
    w1_t, b1_r, w2_t, b2_r = params

    # Small single-step inference (B=2 -> one 8-row tile, single grid step).
    out = jax.block_until_ready(
        linear_qnet_forward(x, w1_t, b1_r, w2_t, b2_r, out_size=output_size))
    ref = jnp.maximum(x @ w1.T + b1, 0.0) @ w2.T + b2
    assert out.shape == (batch, output_size)
    assert jnp.allclose(out, ref, atol=1e-5, rtol=1e-5)

    # Ragged larger batch (500 rows -> padded to 504, single big tile).
    xb = jax.random.normal(kx, (500, input_size), dtype=jnp.float32)
    outb = jax.block_until_ready(
        linear_qnet_forward(xb, w1_t, b1_r, w2_t, b2_r, out_size=output_size))
    refb = jnp.maximum(xb @ w1.T + b1, 0.0) @ w2.T + b2
    assert outb.shape == (500, output_size)
    assert jnp.allclose(outb, refb, atol=1e-4, rtol=1e-4)

    # Batch larger than block_b -> multi-tile grid (exercises the parallel axis;
    # on v7x this shards across both TensorCores).
    xc = jax.random.normal(kx, (600, input_size), dtype=jnp.float32)
    outc = jax.block_until_ready(
        linear_qnet_forward(xc, w1_t, b1_r, w2_t, b2_r,
                            out_size=output_size, block_b=256))
    refc = jnp.maximum(xc @ w1.T + b1, 0.0) @ w2.T + b2
    assert outc.shape == (600, output_size)
    assert jnp.allclose(outc, refc, atol=1e-4, rtol=1e-4)

    print("KERNEL_OK")
</pallas_src>

<mosaic_0001>
module attributes {stable_mosaic.version = 11 : i64} {
  func.func @_qnet_kernel(%arg0: i32, %arg1: memref<8x11xf32, #tpu.memory_space<vmem>>, %arg2: memref<11x256xf32, #tpu.memory_space<vmem>>, %arg3: memref<1x256xf32, #tpu.memory_space<vmem>>, %arg4: memref<256x128xf32, #tpu.memory_space<vmem>>, %arg5: memref<1x128xf32, #tpu.memory_space<vmem>>, %arg6: memref<8x128xf32, #tpu.memory_space<vmem>>) attributes {dimension_semantics = [#tpu.dimension_semantics<parallel>], iteration_bounds = array<i64: 1>, scalar_prefetch = 0 : i64, scratch_operands = 0 : i64, tpu.core_type = #tpu.core_type<tc>, window_params = [{transform_indices = @transform_0, window_bounds = array<i64: 8, 11>}, {pipeline_mode = #tpu.pipeline_mode<synchronous>, transform_indices = @transform_1, window_bounds = array<i64: 11, 256>}, {pipeline_mode = #tpu.pipeline_mode<synchronous>, transform_indices = @transform_2, window_bounds = array<i64: 1, 256>}, {pipeline_mode = #tpu.pipeline_mode<synchronous>, transform_indices = @transform_3, window_bounds = array<i64: 256, 128>}, {pipeline_mode = #tpu.pipeline_mode<synchronous>, transform_indices = @transform_4, window_bounds = array<i64: 1, 128>}, {transform_indices = @transform_5, window_bounds = array<i64: 8, 128>}]} {
    %c0 = arith.constant 0 : index
    %c0_0 = arith.constant 0 : index
    %0 = vector.load %arg1[%c0, %c0_0] : memref<8x11xf32, #tpu.memory_space<vmem>>, vector<8x11xf32>
    %c0_1 = arith.constant 0 : index
    %c0_2 = arith.constant 0 : index
    %1 = vector.load %arg2[%c0_1, %c0_2] : memref<11x256xf32, #tpu.memory_space<vmem>>, vector<11x256xf32>
    %cst = arith.constant dense<0.000000e+00> : vector<8x256xf32>
    %2 = tpu.matmul %0, %1, %cst {dimension_numbers = #tpu.dot_dimension_numbers<[1], [0], [0], [1], [0, 0, 1, 1], [], []>} : vector<8x11xf32>, vector<11x256xf32>, vector<8x256xf32> -> vector<8x256xf32>
    %c0_3 = arith.constant 0 : index
    %c0_4 = arith.constant 0 : index
    %3 = vector.load %arg3[%c0_3, %c0_4] : memref<1x256xf32, #tpu.memory_space<vmem>>, vector<1x256xf32>
    %4 = vector.broadcast %3 : vector<1x256xf32> to vector<8x256xf32>
    %5 = arith.addf %2, %4 : vector<8x256xf32>
    %cst_5 = arith.constant 0.000000e+00 : f32
    %6 = vector.broadcast %cst_5 : f32 to vector<8x256xf32>
    %7 = arith.maximumf %5, %6 : vector<8x256xf32>
    %c0_6 = arith.constant 0 : index
    %c0_7 = arith.constant 0 : index
    %8 = vector.load %arg4[%c0_6, %c0_7] : memref<256x128xf32, #tpu.memory_space<vmem>>, vector<256x128xf32>
    %cst_8 = arith.constant dense<0.000000e+00> : vector<8x128xf32>
    %9 = tpu.matmul %7, %8, %cst_8 {dimension_numbers = #tpu.dot_dimension_numbers<[1], [0], [0], [1], [0, 0, 1, 1], [], []>} : vector<8x256xf32>, vector<256x128xf32>, vector<8x128xf32> -> vector<8x128xf32>
    %c0_9 = arith.constant 0 : index
    %c0_10 = arith.constant 0 : index
    %10 = vector.load %arg5[%c0_9, %c0_10] : memref<1x128xf32, #tpu.memory_space<vmem>>, vector<1x128xf32>
    %11 = vector.broadcast %10 : vector<1x128xf32> to vector<8x128xf32>
    %12 = arith.addf %9, %11 : vector<8x128xf32>
    %c0_11 = arith.constant 0 : index
    %c0_12 = arith.constant 0 : index
    %13 = vector.load %arg6[%c0_11, %c0_12] : memref<8x128xf32, #tpu.memory_space<vmem>>, vector<8x128xf32>
    tpu.vector_store %arg6[%c0_11, %c0_12], %12 {strides = array<i32>} : memref<8x128xf32, #tpu.memory_space<vmem>>, vector<8x128xf32>,
    return
  }
  func.func @transform_0(%arg0: i32) -> (i32, i32) {
    %c0_i32 = arith.constant 0 : i32
    %c0_i32_0 = arith.constant 0 : i32
    return %arg0, %c0_i32 : i32, i32
  }
  func.func @transform_1(%arg0: i32) -> (i32, i32) {
    %c0_i32 = arith.constant 0 : i32
    %c0_i32_0 = arith.constant 0 : i32
    %c0_i32_1 = arith.constant 0 : i32
    return %c0_i32, %c0_i32_0 : i32, i32
  }
  func.func @transform_2(%arg0: i32) -> (i32, i32) {
    %c0_i32 = arith.constant 0 : i32
    %c0_i32_0 = arith.constant 0 : i32
    %c0_i32_1 = arith.constant 0 : i32
    return %c0_i32, %c0_i32_0 : i32, i32
  }
  func.func @transform_3(%arg0: i32) -> (i32, i32) {
    %c0_i32 = arith.constant 0 : i32
    %c0_i32_0 = arith.constant 0 : i32
    %c0_i32_1 = arith.constant 0 : i32
    return %c0_i32, %c0_i32_0 : i32, i32
  }
  func.func @transform_4(%arg0: i32) -> (i32, i32) {
    %c0_i32 = arith.constant 0 : i32
    %c0_i32_0 = arith.constant 0 : i32
    %c0_i32_1 = arith.constant 0 : i32
    return %c0_i32, %c0_i32_0 : i32, i32
  }
  func.func @transform_5(%arg0: i32) -> (i32, i32) {
    %c0_i32 = arith.constant 0 : i32
    %c0_i32_0 = arith.constant 0 : i32
    return %arg0, %c0_i32 : i32, i32
  }
}

</mosaic_0001>

<llo_original>
// kernel: linear_qnet_forward.1
$region0: #{linear_qnet_forward.1}
  #allocation0 [shape = 'u32[]', space=smem, size = 0x4, offset = 0x4, fixed_abs, tag = 'smem constant byte address 0x4 - core index']
  #allocation1 [shape = 'u32[144,128]{1,0:T(1,128)}', space=vmem, size = 0x12000, scoped, tag = 'internal scratch']
  %s0 = inlined_call_operand.vmem [shape: f32[8,11], index: 0, kind: input, shape index: {}]
  %s1 = inlined_call_operand.hbm [shape: f32[11,256], index: 1, kind: input, shape index: {}]
  %s2 = inlined_call_operand.vmem [shape: f32[1,256], index: 2, kind: input, shape index: {}]
  %s3 = inlined_call_operand.hbm [shape: f32[256,128], index: 3, kind: input, shape index: {}]
  %s4 = inlined_call_operand.vmem [shape: f32[1,128], index: 4, kind: input, shape index: {}]
  %s5 = inlined_call_operand.vmem [shape: f32[8,128], index: 5, kind: output, shape index: {}]
  %s6 = sld [smem:[#allocation0]]
  $region38: #{linear_qnet_forward.1} parent=0
    _
  %s8 = ssub.s32 1, %s6
  %s9 = scalar_select 0, %s8, %s6
  $region1: #{linear_qnet_forward.1} parent=0
    #allocation2 [shape = 'u8[16384]{0}', space=vmem, size = 0x4000, scoped, tag = 'input window, operand 1, single buffered']
    #allocation3 [shape = 's32[1]{0}', space=sflag, size = 0x4, scoped, tag = 'scoped memory for linear_qnet_forward.1']
    #allocation4 [shape = 'u8[131072]{0}', space=vmem, size = 0x20000, scoped, tag = 'input window, operand 3, single buffered']
    #allocation5 [shape = 's32[1]{0}', space=sflag, size = 0x4, scoped, tag = 'scoped memory for linear_qnet_forward.1']
    %10 = vsyncpa [#allocation3], 0
    %11 = vsyncpa [#allocation5], 0
    // Predicated region
    $region2: #{linear_qnet_forward.1} parent=1 // pred_check
      _
    $region3: #{linear_qnet_forward.1} parent=1 // pred_check_branch
      %13 = sbr.rel (0) target = $region5
    $region4: #{linear_qnet_forward.1} parent=1 // pred_region
      _
    $region5: #{linear_qnet_forward.1} parent=1 // pred_fallthru
      _
    // Predicated region
    $region6: #{linear_qnet_forward.1} parent=1 // pred_check
      _
    $region7: #{linear_qnet_forward.1} parent=1 // pred_check_branch
      %15 = sbr.rel (0) target = $region9
    $region8: #{linear_qnet_forward.1} parent=1 // pred_region
      %s17 = ssub.s32 512, 512
      %18 = vsyncadd [#allocation3], %s17
      %s19 = sshll.u32 [#allocation2], 4
      %s20 = int_to_ptr.vmem [resolvable:$true] %s19
      %25 = dma.hbm_to_vmem [thread:$0]  %s1, 512, %s20, [#allocation3], 256, 256, 16
    $region9: #{linear_qnet_forward.1} parent=1 // pred_fallthru
      _
    // Predicated region
    $region10: #{linear_qnet_forward.1} parent=1 // pred_check
      _
    $region11: #{linear_qnet_forward.1} parent=1 // pred_check_branch
      %27 = sbr.rel (0) target = $region13
    $region12: #{linear_qnet_forward.1} parent=1 // pred_region
      _
    $region13: #{linear_qnet_forward.1} parent=1 // pred_fallthru
      _
    // Predicated region
    $region14: #{linear_qnet_forward.1} parent=1 // pred_check
      _
    $region15: #{linear_qnet_forward.1} parent=1 // pred_check_branch
      %29 = sbr.rel (0) target = $region17
    $region16: #{linear_qnet_forward.1} parent=1 // pred_region
      %s31 = ssub.s32 4096, 4096
      %32 = vsyncadd [#allocation5], %s31
      %s33 = sshll.u32 [#allocation4], 4
      %s34 = int_to_ptr.vmem [resolvable:$true] %s33
      %39 = dma.hbm_to_vmem [thread:$0]  %s3, 4096, %s34, [#allocation5], 128, 128, 8
    $region17: #{linear_qnet_forward.1} parent=1 // pred_fallthru
      _
    // Predicated region
    $region18: #{linear_qnet_forward.1} parent=1 // pred_check
      _
    $region19: #{linear_qnet_forward.1} parent=1 // pred_check_branch
      %41 = sbr.rel (0) target = $region21
    $region20: #{linear_qnet_forward.1} parent=1 // pred_region
      _
    $region21: #{linear_qnet_forward.1} parent=1 // pred_fallthru
      _
    // Predicated region
    $region22: #{linear_qnet_forward.1} parent=1 // pred_check
      _
    $region23: #{linear_qnet_forward.1} parent=1 // pred_check_branch
      %43 = sbr.rel (0) target = $region25
    $region24: #{linear_qnet_forward.1} parent=1 // pred_region
      %44 = dma.done [#allocation3], 512
    $region25: #{linear_qnet_forward.1} parent=1 // pred_fallthru
      _
    // Predicated region
    $region26: #{linear_qnet_forward.1} parent=1 // pred_check
      _
    $region27: #{linear_qnet_forward.1} parent=1 // pred_check_branch
      %46 = sbr.rel (0) target = $region29
    $region28: #{linear_qnet_forward.1} parent=1 // pred_region
      %47 = dma.done [#allocation5], 4096
    $region29: #{linear_qnet_forward.1} parent=1 // pred_fallthru
      _
    %v48 = vld [vmem:[%s0] sm:$0xff]
    %v49 = vld [vmem:[#allocation2] sm:$0xff]
    %v50 = vld [vmem:[#allocation2 + $0x8] sm:$0xff]
    %v51 = vld [vmem:[#allocation2 + $0x10] sm:$0x7]
    %v52 = vld [vmem:[#allocation2 + $0x18] sm:$0x7]
    %v53 = vld [vmem:[%s2] sm:$0x3]
    %v55 = vlaneseq
    %v56 = vshrl.u32 %v55, 7
    %v57 = vsub.s32 0, %v56
    %v58 = vrot.slane %v53, %v57
    %v59 = vlaneseq
    %v60 = vshrl.u32 %v59, 7
    %v61 = vsub.s32 1, %v60
    %v62 = vrot.slane %v53, %v61
    %vm65 = vcmask 89088
    %v67 = vsel %vm65, %v48, 0
    %vm69 = vcmask 1042432
    %v71 = vsel %vm69, %v51, 0
    %v74 = vsel %vm69, %v52, 0
    %76 = vmatprep.subr.mxu0 0.0
    %77 = vmatpush1.msra.mxu0 0.0
    %78 = vmatprep.subr.mxu0 0.0
    %79 = vmatpush1.msra.mxu0 0.0
    %80 = vmatprep.subr.mxu0 0.0
    %81 = vmatpush1.msra.mxu0 0.0
    %82 = vmatprep.subr.mxu0 0.0
    %83 = vmatpush1.msra.mxu0 0.0
    %84 = vmatprep.subr.mxu0 0.0
    %85 = vmatpush1.msra.mxu0 0.0
    %86 = vmatprep.subr.mxu0 0.0
    %87 = vmatpush1.msra.mxu0 0.0
    %88 = vmatprep.subr.mxu0 0.0
    %89 = vmatpush1.msra.mxu0 0.0
    %90 = vmatprep.subr.mxu0 0.0
    %91 = vmatpush1.msra.mxu0 0.0
    %92 = vmatprep.subr.mxu0 0.0
    %93 = vmatpush1.msra.mxu0 0.0
    %94 = vmatprep.subr.mxu0 0.0
    %95 = vmatpush1.msra.mxu0 0.0
    %96 = vmatprep.subr.mxu0 0.0
    %97 = vmatpush1.msra.mxu0 0.0
    %98 = vmatprep.subr.mxu0 0.0
    %99 = vmatpush1.msra.mxu0 0.0
    %100 = vmatprep.subr.mxu0 0.0
    %101 = vmatpush1.msra.mxu0 0.0
    %102 = vmatprep.subr.mxu0 0.0
    %103 = vmatpush1.msra.mxu0 0.0
    %104 = vmatprep.subr.mxu0 %v74
    %105 = vmatpush1.msra.mxu0 %v71
    %106 = vmatprep.subr.mxu0 %v50
    %107 = vmatpush1.msra.mxu0 %v49
    %108 = vmatprep.subr.mxu0 0.0
    %109 = vmatpush2.msra.mxu0 0.0
    %110 = vmatprep.subr.mxu0 0.0
    %111 = vmatpush2.msra.mxu0 0.0
    %112 = vmatprep.subr.mxu0 0.0
    %113 = vmatpush2.msra.mxu0 0.0
    %114 = vmatprep.subr.mxu0 0.0
    %115 = vmatpush2.msra.mxu0 0.0
    %116 = vmatprep.subr.mxu0 0.0
    %117 = vmatpush2.msra.mxu0 0.0
    %118 = vmatprep.subr.mxu0 0.0
    %119 = vmatpush2.msra.mxu0 0.0
    %120 = vmatprep.subr.mxu0 0.0
    %121 = vmatpush2.msra.mxu0 0.0
    %122 = vmatprep.subr.mxu0 0.0
    %123 = vmatpush2.msra.mxu0 0.0
    %124 = vmatprep.subr.mxu0 0.0
    %125 = vmatpush2.msra.mxu0 0.0
    %126 = vmatprep.subr.mxu0 0.0
    %127 = vmatpush2.msra.mxu0 0.0
    %128 = vmatprep.subr.mxu0 0.0
    %129 = vmatpush2.msra.mxu0 0.0
    %130 = vmatprep.subr.mxu0 0.0
    %131 = vmatpush2.msra.mxu0 0.0
    %132 = vmatprep.subr.mxu0 0.0
    %133 = vmatpush2.msra.mxu0 0.0
    %134 = vmatprep.subr.mxu0 0.0
    %135 = vmatpush2.msra.mxu0 0.0
    %136 = vmatprep.subr.mxu0 0.0
    %137 = vmatpush2.msra.mxu0 0.0
    %138 = vmatprep.subr.mxu0 0.0
    %139 = vmatpush2.msra.mxu0 0.0
    %140 = vmatprep.mubr.f32.mxu0 0.0
    %141 = vmatmul.mubr.f32.gmra.mxu0 %v67
    %v142 = vpop.f32.mrf.mxu0
    %v143 = vadd.f32 %v58, %v142
    %v144 = vpop.f32.mrf.mxu0
    %v145 = vadd.f32 %v62, %v144
    %146 = vdwg.mxu0
    %v147 = vmax.f32 %v143, 0.0
    %v148 = vmax.f32 %v145, 0.0
    %v149 = vld [vmem:[#allocation4] sm:$0xff]
    %v150 = vld [vmem:[#allocation4 + $0x8] sm:$0xff]
    %v151 = vld [vmem:[#allocation4 + $0x10] sm:$0xff]
    %v152 = vld [vmem:[#allocation4 + $0x18] sm:$0xff]
    %v153 = vld [vmem:[#allocation4 + $0x20] sm:$0xff]
    %v154 = vld [vmem:[#allocation4 + $0x28] sm:$0xff]
    %v155 = vld [vmem:[#allocation4 + $0x30] sm:$0xff]
    %v156 = vld [vmem:[#allocation4 + $0x38] sm:$0xff]
    %v157 = vld [vmem:[#allocation4 + $0x40] sm:$0xff]
    %v158 = vld [vmem:[#allocation4 + $0x48] sm:$0xff]
    %v159 = vld [vmem:[#allocation4 + $0x50] sm:$0xff]
    %v160 = vld [vmem:[#allocation4 + $0x58] sm:$0xff]
    %v161 = vld [vmem:[#allocation4 + $0x60] sm:$0xff]
    %v162 = vld [vmem:[#allocation4 + $0x68] sm:$0xff]
    %v163 = vld [vmem:[#allocation4 + $0x70] sm:$0xff]
    %v164 = vld [vmem:[#allocation4 + $0x78] sm:$0xff]
    %v165 = vld [vmem:[#allocation4 + $0x80] sm:$0xff]
    %v166 = vld [vmem:[#allocation4 + $0x88] sm:$0xff]
    %v167 = vld [vmem:[#allocation4 + $0x90] sm:$0xff]
    %v168 = vld [vmem:[#allocation4 + $0x98] sm:$0xff]
    %v169 = vld [vmem:[#allocation4 + $0xa0] sm:$0xff]
    %v170 = vld [vmem:[#allocation4 + $0xa8] sm:$0xff]
    %v171 = vld [vmem:[#allocation4 + $0xb0] sm:$0xff]
    %v172 = vld [vmem:[#allocation4 + $0xb8] sm:$0xff]
    %v173 = vld [vmem:[#allocation4 + $0xc0] sm:$0xff]
    %v174 = vld [vmem:[#allocation4 + $0xc8] sm:$0xff]
    %v175 = vld [vmem:[#allocation4 + $0xd0] sm:$0xff]
    %v176 = vld [vmem:[#allocation4 + $0xd8] sm:$0xff]
    %v177 = vld [vmem:[#allocation4 + $0xe0] sm:$0xff]
    %v178 = vld [vmem:[#allocation4 + $0xe8] sm:$0xff]
    %v179 = vld [vmem:[#allocation4 + $0xf0] sm:$0xff]
    %v180 = vld [vmem:[#allocation4 + $0xf8] sm:$0xff]
    %v181 = vld [vmem:[%s4] sm:$0x1]
    %v183 = vlaneseq
    %v184 = vshrl.u32 %v183, 7
    %v185 = vsub.s32 0, %v184
    %v186 = vrot.slane %v181, %v185
    %188 = vmatprep.subr.mxu0 0.0
    %189 = vmatpush1.msra.mxu0 %v164
    %190 = vmatprep.subr.mxu0 0.0
    %191 = vmatpush1.msra.mxu0 %v163
    %192 = vmatprep.subr.mxu0 0.0
    %193 = vmatpush1.msra.mxu0 %v162
    %194 = vmatprep.subr.mxu0 0.0
    %195 = vmatpush1.msra.mxu0 %v161
    %196 = vmatprep.subr.mxu0 0.0
    %197 = vmatpush1.msra.mxu0 %v160
    %198 = vmatprep.subr.mxu0 0.0
    %199 = vmatpush1.msra.mxu0 %v159
    %200 = vmatprep.subr.mxu0 0.0
    %201 = vmatpush1.msra.mxu0 %v158
    %202 = vmatprep.subr.mxu0 0.0
    %203 = vmatpush1.msra.mxu0 %v157
    %204 = vmatprep.subr.mxu0 0.0
    %205 = vmatpush1.msra.mxu0 %v156
    %206 = vmatprep.subr.mxu0 0.0
    %207 = vmatpush1.msra.mxu0 %v155
    %208 = vmatprep.subr.mxu0 0.0
    %209 = vmatpush1.msra.mxu0 %v154
    %210 = vmatprep.subr.mxu0 0.0
    %211 = vmatpush1.msra.mxu0 %v153
    %212 = vmatprep.subr.mxu0 0.0
    %213 = vmatpush1.msra.mxu0 %v152
    %214 = vmatprep.subr.mxu0 0.0
    %215 = vmatpush1.msra.mxu0 %v151
    %216 = vmatprep.subr.mxu0 0.0
    %217 = vmatpush1.msra.mxu0 %v150
    %218 = vmatprep.subr.mxu0 0.0
    %219 = vmatpush1.msra.mxu0 %v149
    %220 = vmatprep.subr.mxu0 0.0
    %221 = vmatpush2.msra.mxu0 %v180
    %222 = vmatprep.subr.mxu0 0.0
    %223 = vmatpush2.msra.mxu0 %v179
    %224 = vmatprep.subr.mxu0 0.0
    %225 = vmatpush2.msra.mxu0 %v178
    %226 = vmatprep.subr.mxu0 0.0
    %227 = vmatpush2.msra.mxu0 %v177
    %228 = vmatprep.subr.mxu0 0.0
    %229 = vmatpush2.msra.mxu0 %v176
    %230 = vmatprep.subr.mxu0 0.0
    %231 = vmatpush2.msra.mxu0 %v175
    %232 = vmatprep.subr.mxu0 0.0
    %233 = vmatpush2.msra.mxu0 %v174
    %234 = vmatprep.subr.mxu0 0.0
    %235 = vmatpush2.msra.mxu0 %v173
    %236 = vmatprep.subr.mxu0 0.0
    %237 = vmatpush2.msra.mxu0 %v172
    %238 = vmatprep.subr.mxu0 0.0
    %239 = vmatpush2.msra.mxu0 %v171
    %240 = vmatprep.subr.mxu0 0.0
    %241 = vmatpush2.msra.mxu0 %v170
    %242 = vmatprep.subr.mxu0 0.0
    %243 = vmatpush2.msra.mxu0 %v169
    %244 = vmatprep.subr.mxu0 0.0
    %245 = vmatpush2.msra.mxu0 %v168
    %246 = vmatprep.subr.mxu0 0.0
    %247 = vmatpush2.msra.mxu0 %v167
    %248 = vmatprep.subr.mxu0 0.0
    %249 = vmatpush2.msra.mxu0 %v166
    %250 = vmatprep.subr.mxu0 0.0
    %251 = vmatpush2.msra.mxu0 %v165
    %252 = vmatprep.mubr.f32.mxu0 %v148
    %253 = vmatmul.mubr.f32.gmra.mxu0 %v147
    %v254 = vpop.f32.mrf.mxu0
    %v255 = vadd.f32 %v186, %v254
    %v256 = vpop.f32.mrf.mxu0
    %257 = vdwg.mxu0
    %258 = vst [vmem:[%s5] sm:$0xff] %v255
    // Predicated region
    $region30: #{linear_qnet_forward.1} parent=1 // pred_check
      _
    $region31: #{linear_qnet_forward.1} parent=1 // pred_check_branch
      %260 = sbr.rel (0) target = $region33
    $region32: #{linear_qnet_forward.1} parent=1 // pred_region
      _
    $region33: #{linear_qnet_forward.1} parent=1 // pred_fallthru
      _
    // Predicated region
    $region34: #{linear_qnet_forward.1} parent=1 // pred_check
      _
    $region35: #{linear_qnet_forward.1} parent=1 // pred_check_branch
      %262 = sbr.rel (0) target = $region37
    $region36: #{linear_qnet_forward.1} parent=1 // pred_region
      _
    $region37: #{linear_qnet_forward.1} parent=1 // pred_fallthru
      _
    %263 = vsyncpa [#allocation3], 1
    %264 = vsyncpa [#allocation5], 1

</llo_original>
